<compile_context>
chip_gen: v7x
topology: tpu7x:2x2x1
jax: 0.10.0
libtpu: 0.0.40
codegen_flags: <defaults>
</compile_context>

<pallas_src>
import jax
import jax.numpy as jnp
import numpy as np
from jax.experimental import pallas as pl
from jax.experimental.pallas import tpu as pltpu


def _align8(r):
    return ((r + 7) // 8) * 8


def make_temporal_gcn_forward(A, params):
    """Build a jitted forward(x: (N,T) f32) -> (N,T) f32 for fixed A / params."""
    f32 = jnp.float32
    A = jnp.asarray(A, f32)                       # (N, N)
    N = A.shape[0]
    w_gc = jnp.asarray(params["w_gc"], f32)       # (Hg, 1)
    b_gc = jnp.asarray(params["b_gc"], f32)       # (Hg,)
    w_ih = jnp.asarray(params["w_ih"], f32)       # (4Hr, N*Hg)
    b_ih = jnp.asarray(params["b_ih"], f32)       # (4Hr,)
    w_hh = jnp.asarray(params["w_hh"], f32)       # (4Hr, Hr)
    b_hh = jnp.asarray(params["b_hh"], f32)       # (4Hr,)
    w_lin = jnp.asarray(params["w_lin"], f32)     # (N, Hr)
    b_lin = jnp.asarray(params["b_lin"], f32)     # (N,)
    Hg = w_gc.shape[0]
    Hr = w_hh.shape[1]
    D = N * Hg
    G = 4 * Hr

    # ---------------- one-time weight-layout glue (folded GraphConv) -------------
    # GraphConvolution folded:  A @ (x_t w^T + 1 b^T) = w ⊙ (A x_t) + (A 1) b^T
    rowsum = jnp.sum(A, axis=1)                                    # (N,)  = A @ 1
    # AW[m, h*N + n] = A[n, m] * w_gc[h]   (h-major flatten of the graph features)
    aw = (A.T[:, None, :] * w_gc[:, 0][None, :, None]).reshape(N, D)
    # rb[0, h*N + n] = rowsum_A[n] * b_gc[h]
    rb = (b_gc[:, None] * rowsum[None, :]).reshape(1, D)
    # wih2[h*N + n, k] = w_ih[k, n*Hg + h]   (matches the h-major g2 layout)
    wih2 = w_ih.T.reshape(N, Hg, G).transpose(1, 0, 2).reshape(D, G)
    bg = (b_ih + b_hh).reshape(1, G)
    whh_t = w_hh.T                                                 # (Hr, 4Hr)
    blin_col = b_lin.reshape(N, 1)                                 # (N, 1)

    # -------- pack every per-model constant into one VMEM slab (2 operands) ------
    pieces = [aw, rb, wih2, bg, whh_t, w_lin, blin_col]
    W = max(p.shape[1] for p in pieces)
    W = ((W + 127) // 128) * 128            # lane-dense slab width
    offs, row = [], 0
    for p in pieces:
        offs.append(row)
        row = _align8(row + p.shape[0])     # 8-aligned sublane offsets -> clean slices
    R = _align8(row)
    slab = jnp.zeros((R, W), f32)
    for p, r in zip(pieces, offs):
        slab = slab.at[r:r + p.shape[0], :p.shape[1]].set(p)
    r_aw, r_rb, r_wih, r_bg, r_whh, r_wlin, r_blin = offs

    def forward(x):
        x = jnp.asarray(x, f32)             # (N, T)
        T = x.shape[1]

        def kernel(x_ref, c_ref, out_ref):
            # ------- static slices of the packed constant slab (all VMEM) -------
            aw_k = c_ref[r_aw:r_aw + N, :D]            # (N, D)
            rb_k = c_ref[r_rb:r_rb + 1, :D]            # (1, D)
            wih_k = c_ref[r_wih:r_wih + D, :G]         # (D, 4Hr)
            bg_k = c_ref[r_bg:r_bg + 1, :G]            # (1, 4Hr)
            whh_k = c_ref[r_whh:r_whh + Hr, :G]        # (Hr, 4Hr)
            wlin_k = c_ref[r_wlin:r_wlin + N, :Hr]     # (N, Hr)
            blin_k = c_ref[r_blin:r_blin + N, 0:1]     # (N, 1)

            # ------- batched, h-independent preamble over all T timesteps -------
            # TODO(synk): nn.Dropout(p=0.5) is treated as eval-mode identity.
            x_tn = x_ref[...].T                                          # (T, N)
            g2 = jnp.maximum(
                jnp.dot(x_tn, aw_k, preferred_element_type=f32) + rb_k, 0.0)   # (T, D)
            gates_x = jnp.dot(g2, wih_k, preferred_element_type=f32) + bg_k    # (T, 4Hr)

            # ------- strictly serial LSTM recurrence (gate order i, f, g, o) ----
            h_t = jnp.zeros((1, Hr), f32)
            c_t = jnp.zeros((1, Hr), f32)
            hs = []
            for t in range(T):          # T small & static -> fully unrolled
                gates = gates_x[t:t + 1, :] + jnp.dot(
                    h_t, whh_k, preferred_element_type=f32)              # (1, 4Hr)
                sig = jax.nn.sigmoid(gates)      # one EUP pass covers i/f/o
                i_g = sig[:, 0:Hr]
                f_g = sig[:, Hr:2 * Hr]
                o_g = sig[:, 3 * Hr:4 * Hr]
                g_g = jnp.tanh(gates[:, 2 * Hr:3 * Hr])
                c_t = f_g * c_t + i_g * g_g
                h_t = o_g * jnp.tanh(c_t)
                hs.append(h_t)                   # history kept in registers
            h_hist = jnp.concatenate(hs, axis=0)                         # (T, Hr)

            # ------- batched output Linear, (N, T) produced directly ------------
            out_ref[...] = (jnp.dot(wlin_k, h_hist.T,
                                    preferred_element_type=f32) + blin_k)

        vmem = pl.BlockSpec(memory_space=pltpu.MemorySpace.VMEM)
        return pl.pallas_call(
            kernel,
            out_shape=jax.ShapeDtypeStruct((N, T), f32),
            in_specs=[vmem, vmem],
            out_specs=vmem,
        )(x, slab)

    return jax.jit(forward)


def ref_forward(x, A, params):
    """Pure-JAX reference mirroring the PyTorch forward (future=0, eval mode)."""
    N, T = x.shape
    Hr = params["w_hh"].shape[1]
    h = jnp.zeros((1, Hr), jnp.float32)
    c = jnp.zeros((1, Hr), jnp.float32)
    outs = []
    for t in range(T):
        xt = x[:, t:t + 1]                                    # (N, 1)
        support = xt @ params["w_gc"].T + params["b_gc"]      # (N, Hg)
        s = A @ support                                       # (N, Hg)
        g = jax.nn.relu(s).reshape(1, -1)                     # (1, N*Hg)
        gates = (g @ params["w_ih"].T + params["b_ih"]
                 + h @ params["w_hh"].T + params["b_hh"])
        i_g, f_g, g_g, o_g = jnp.split(gates, 4, axis=1)
        i_g = jax.nn.sigmoid(i_g)
        f_g = jax.nn.sigmoid(f_g)
        g_g = jnp.tanh(g_g)
        o_g = jax.nn.sigmoid(o_g)
        c = f_g * c + i_g * g_g
        h = o_g * jnp.tanh(c)
        out = h @ params["w_lin"].T + params["b_lin"]         # (1, N)
        outs.append(out.T)                                    # (N, 1)
    return jnp.concatenate(outs, axis=1)                      # (N, T)


def init_params(key, N, Hg, Hr):
    D = N * Hg
    ks = jax.random.split(key, 8)

    def u(k, shape, fan_in):
        bound = 1.0 / np.sqrt(fan_in)
        return jax.random.uniform(k, shape, jnp.float32, -bound, bound)

    return {
        "w_gc": u(ks[0], (Hg, 1), 1),        # GraphConvolution fc (input_size_gnn=1)
        "b_gc": u(ks[1], (Hg,), 1),
        "w_ih": u(ks[2], (4 * Hr, D), Hr),   # LSTMCell
        "b_ih": u(ks[3], (4 * Hr,), Hr),
        "w_hh": u(ks[4], (4 * Hr, Hr), Hr),
        "b_hh": u(ks[5], (4 * Hr,), Hr),
        "w_lin": u(ks[6], (N, Hr), Hr),      # output Linear
        "b_lin": u(ks[7], (N,), Hr),
    }


if __name__ == "__main__":
    # Shapes implied by the module: input_size_gnn=1, input_n_graph=16,
    # hidden_size_gnn=4, hidden_size_rnn=32, sequence length T=8.
    N, T, Hg, Hr = 16, 8, 4, 32
    key = jax.random.PRNGKey(0)
    k_a, k_x, k_p = jax.random.split(key, 3)

    adj = (jax.random.uniform(k_a, (N, N)) > 0.5).astype(jnp.float32) + jnp.eye(N)
    A = adj / jnp.sum(adj, axis=1, keepdims=True)   # normalized propagation adj
    x = jax.random.normal(k_x, (N, T), jnp.float32)
    params = init_params(k_p, N, Hg, Hr)

    forward = make_temporal_gcn_forward(A, params)   # weight glue built once
    out = jax.block_until_ready(forward(x))          # one jitted dispatch
    ref = ref_forward(x, A, params)
    # Tolerance accounts for TPU default f32 matmul precision (MXU bf16 passes)
    # under the algebraically folded GraphConv / gate projection.
    np.testing.assert_allclose(np.asarray(out), np.asarray(ref), rtol=1e-2, atol=1e-2)
    print("KERNEL_OK")
</pallas_src>

<mosaic_0001>
module attributes {stable_mosaic.version = 11 : i64} {
  func.func @kernel(%arg0: memref<16x8xf32, #tpu.memory_space<vmem>>, %arg1: memref<160x128xf32, #tpu.memory_space<vmem>>, %arg2: memref<16x8xf32, #tpu.memory_space<vmem>>) attributes {dimension_semantics = [], scalar_prefetch = 0 : i64, scratch_operands = 0 : i64, tpu.core_type = #tpu.core_type<tc>} {
    %c0 = arith.constant 0 : index
    %c0_0 = arith.constant 0 : index
    %0 = vector.load %arg1[%c0, %c0_0] : memref<160x128xf32, #tpu.memory_space<vmem>>, vector<16x64xf32>
    %c16 = arith.constant 16 : index
    %c0_1 = arith.constant 0 : index
    %1 = vector.load %arg1[%c16, %c0_1] : memref<160x128xf32, #tpu.memory_space<vmem>>, vector<1x64xf32>
    %c24 = arith.constant 24 : index
    %c0_2 = arith.constant 0 : index
    %2 = vector.load %arg1[%c24, %c0_2] : memref<160x128xf32, #tpu.memory_space<vmem>>, vector<64x128xf32>
    %c88 = arith.constant 88 : index
    %c0_3 = arith.constant 0 : index
    %3 = vector.load %arg1[%c88, %c0_3] : memref<160x128xf32, #tpu.memory_space<vmem>>, vector<1x128xf32>
    %c96 = arith.constant 96 : index
    %c0_4 = arith.constant 0 : index
    %4 = vector.load %arg1[%c96, %c0_4] : memref<160x128xf32, #tpu.memory_space<vmem>>, vector<32x128xf32>
    %c128 = arith.constant 128 : index
    %c0_5 = arith.constant 0 : index
    %5 = vector.load %arg1[%c128, %c0_5] : memref<160x128xf32, #tpu.memory_space<vmem>>, vector<16x32xf32>
    %c144 = arith.constant 144 : index
    %c0_6 = arith.constant 0 : index
    %6 = vector.load %arg1[%c144, %c0_6] : memref<160x128xf32, #tpu.memory_space<vmem>>, vector<16x1xf32>
    %c0_7 = arith.constant 0 : index
    %c0_8 = arith.constant 0 : index
    %7 = vector.load %arg0[%c0_7, %c0_8] : memref<16x8xf32, #tpu.memory_space<vmem>>, vector<16x8xf32>
    %8 = tpu.transpose %7, [1, 0] : vector<16x8xf32> -> vector<8x16xf32>
    %cst = arith.constant dense<0.000000e+00> : vector<8x64xf32>
    %9 = tpu.matmul %8, %0, %cst {dimension_numbers = #tpu.dot_dimension_numbers<[1], [0], [0], [1], [0, 0, 1, 1], [], []>} : vector<8x16xf32>, vector<16x64xf32>, vector<8x64xf32> -> vector<8x64xf32>
    %10 = vector.broadcast %1 : vector<1x64xf32> to vector<8x64xf32>
    %11 = arith.addf %9, %10 : vector<8x64xf32>
    %cst_9 = arith.constant 0.000000e+00 : f32
    %12 = vector.broadcast %cst_9 : f32 to vector<8x64xf32>
    %13 = arith.maximumf %11, %12 : vector<8x64xf32>
    %cst_10 = arith.constant dense<0.000000e+00> : vector<8x128xf32>
    %14 = tpu.matmul %13, %2, %cst_10 {dimension_numbers = #tpu.dot_dimension_numbers<[1], [0], [0], [1], [0, 0, 1, 1], [], []>} : vector<8x64xf32>, vector<64x128xf32>, vector<8x128xf32> -> vector<8x128xf32>
    %15 = vector.broadcast %3 : vector<1x128xf32> to vector<8x128xf32>
    %16 = arith.addf %14, %15 : vector<8x128xf32>
    %cst_11 = arith.constant 0.000000e+00 : f32
    %17 = vector.broadcast %cst_11 : f32 to vector<1x32xf32>
    %cst_12 = arith.constant 0.000000e+00 : f32
    %18 = vector.broadcast %cst_12 : f32 to vector<1x32xf32>
    %19 = vector.extract_strided_slice %16 {offsets = [0, 0], sizes = [1, 128], strides = [1, 1]} : vector<8x128xf32> to vector<1x128xf32>
    %cst_13 = arith.constant dense<0.000000e+00> : vector<1x128xf32>
    %20 = tpu.matmul %17, %4, %cst_13 {dimension_numbers = #tpu.dot_dimension_numbers<[1], [0], [0], [1], [0, 0, 1, 1], [], []>} : vector<1x32xf32>, vector<32x128xf32>, vector<1x128xf32> -> vector<1x128xf32>
    %21 = arith.addf %19, %20 : vector<1x128xf32>
    %22 = arith.negf %21 : vector<1x128xf32>
    %23 = math.exp %22 : vector<1x128xf32>
    %cst_14 = arith.constant 1.000000e+00 : f32
    %24 = vector.broadcast %cst_14 : f32 to vector<1x128xf32>
    %25 = arith.addf %24, %23 : vector<1x128xf32>
    %26 = arith.divf %24, %25 : vector<1x128xf32>
    %27 = vector.extract_strided_slice %26 {offsets = [0, 0], sizes = [1, 32], strides = [1, 1]} : vector<1x128xf32> to vector<1x32xf32>
    %28 = vector.extract_strided_slice %26 {offsets = [0, 32], sizes = [1, 32], strides = [1, 1]} : vector<1x128xf32> to vector<1x32xf32>
    %29 = vector.extract_strided_slice %26 {offsets = [0, 96], sizes = [1, 32], strides = [1, 1]} : vector<1x128xf32> to vector<1x32xf32>
    %30 = vector.extract_strided_slice %21 {offsets = [0, 64], sizes = [1, 32], strides = [1, 1]} : vector<1x128xf32> to vector<1x32xf32>
    %31 = math.tanh %30 : vector<1x32xf32>
    %32 = arith.mulf %28, %18 : vector<1x32xf32>
    %33 = arith.mulf %27, %31 : vector<1x32xf32>
    %34 = arith.addf %32, %33 : vector<1x32xf32>
    %35 = math.tanh %34 : vector<1x32xf32>
    %36 = arith.mulf %29, %35 : vector<1x32xf32>
    %37 = vector.extract_strided_slice %16 {offsets = [1, 0], sizes = [1, 128], strides = [1, 1]} : vector<8x128xf32> to vector<1x128xf32>
    %cst_15 = arith.constant dense<0.000000e+00> : vector<1x128xf32>
    %38 = tpu.matmul %36, %4, %cst_15 {dimension_numbers = #tpu.dot_dimension_numbers<[1], [0], [0], [1], [0, 0, 1, 1], [], []>} : vector<1x32xf32>, vector<32x128xf32>, vector<1x128xf32> -> vector<1x128xf32>
    %39 = arith.addf %37, %38 : vector<1x128xf32>
    %40 = arith.negf %39 : vector<1x128xf32>
    %41 = math.exp %40 : vector<1x128xf32>
    %cst_16 = arith.constant 1.000000e+00 : f32
    %42 = vector.broadcast %cst_16 : f32 to vector<1x128xf32>
    %43 = arith.addf %42, %41 : vector<1x128xf32>
    %44 = arith.divf %42, %43 : vector<1x128xf32>
    %45 = vector.extract_strided_slice %44 {offsets = [0, 0], sizes = [1, 32], strides = [1, 1]} : vector<1x128xf32> to vector<1x32xf32>
    %46 = vector.extract_strided_slice %44 {offsets = [0, 32], sizes = [1, 32], strides = [1, 1]} : vector<1x128xf32> to vector<1x32xf32>
    %47 = vector.extract_strided_slice %44 {offsets = [0, 96], sizes = [1, 32], strides = [1, 1]} : vector<1x128xf32> to vector<1x32xf32>
    %48 = vector.extract_strided_slice %39 {offsets = [0, 64], sizes = [1, 32], strides = [1, 1]} : vector<1x128xf32> to vector<1x32xf32>
    %49 = math.tanh %48 : vector<1x32xf32>
    %50 = arith.mulf %46, %34 : vector<1x32xf32>
    %51 = arith.mulf %45, %49 : vector<1x32xf32>
    %52 = arith.addf %50, %51 : vector<1x32xf32>
    %53 = math.tanh %52 : vector<1x32xf32>
    %54 = arith.mulf %47, %53 : vector<1x32xf32>
    %55 = vector.extract_strided_slice %16 {offsets = [2, 0], sizes = [1, 128], strides = [1, 1]} : vector<8x128xf32> to vector<1x128xf32>
    %cst_17 = arith.constant dense<0.000000e+00> : vector<1x128xf32>
    %56 = tpu.matmul %54, %4, %cst_17 {dimension_numbers = #tpu.dot_dimension_numbers<[1], [0], [0], [1], [0, 0, 1, 1], [], []>} : vector<1x32xf32>, vector<32x128xf32>, vector<1x128xf32> -> vector<1x128xf32>
    %57 = arith.addf %55, %56 : vector<1x128xf32>
    %58 = arith.negf %57 : vector<1x128xf32>
    %59 = math.exp %58 : vector<1x128xf32>
    %cst_18 = arith.constant 1.000000e+00 : f32
    %60 = vector.broadcast %cst_18 : f32 to vector<1x128xf32>
    %61 = arith.addf %60, %59 : vector<1x128xf32>
    %62 = arith.divf %60, %61 : vector<1x128xf32>
    %63 = vector.extract_strided_slice %62 {offsets = [0, 0], sizes = [1, 32], strides = [1, 1]} : vector<1x128xf32> to vector<1x32xf32>
    %64 = vector.extract_strided_slice %62 {offsets = [0, 32], sizes = [1, 32], strides = [1, 1]} : vector<1x128xf32> to vector<1x32xf32>
    %65 = vector.extract_strided_slice %62 {offsets = [0, 96], sizes = [1, 32], strides = [1, 1]} : vector<1x128xf32> to vector<1x32xf32>
    %66 = vector.extract_strided_slice %57 {offsets = [0, 64], sizes = [1, 32], strides = [1, 1]} : vector<1x128xf32> to vector<1x32xf32>
    %67 = math.tanh %66 : vector<1x32xf32>
    %68 = arith.mulf %64, %52 : vector<1x32xf32>
    %69 = arith.mulf %63, %67 : vector<1x32xf32>
    %70 = arith.addf %68, %69 : vector<1x32xf32>
    %71 = math.tanh %70 : vector<1x32xf32>
    %72 = arith.mulf %65, %71 : vector<1x32xf32>
    %73 = vector.extract_strided_slice %16 {offsets = [3, 0], sizes = [1, 128], strides = [1, 1]} : vector<8x128xf32> to vector<1x128xf32>
    %cst_19 = arith.constant dense<0.000000e+00> : vector<1x128xf32>
    %74 = tpu.matmul %72, %4, %cst_19 {dimension_numbers = #tpu.dot_dimension_numbers<[1], [0], [0], [1], [0, 0, 1, 1], [], []>} : vector<1x32xf32>, vector<32x128xf32>, vector<1x128xf32> -> vector<1x128xf32>
    %75 = arith.addf %73, %74 : vector<1x128xf32>
    %76 = arith.negf %75 : vector<1x128xf32>
    %77 = math.exp %76 : vector<1x128xf32>
    %cst_20 = arith.constant 1.000000e+00 : f32
    %78 = vector.broadcast %cst_20 : f32 to vector<1x128xf32>
    %79 = arith.addf %78, %77 : vector<1x128xf32>
    %80 = arith.divf %78, %79 : vector<1x128xf32>
    %81 = vector.extract_strided_slice %80 {offsets = [0, 0], sizes = [1, 32], strides = [1, 1]} : vector<1x128xf32> to vector<1x32xf32>
    %82 = vector.extract_strided_slice %80 {offsets = [0, 32], sizes = [1, 32], strides = [1, 1]} : vector<1x128xf32> to vector<1x32xf32>
    %83 = vector.extract_strided_slice %80 {offsets = [0, 96], sizes = [1, 32], strides = [1, 1]} : vector<1x128xf32> to vector<1x32xf32>
    %84 = vector.extract_strided_slice %75 {offsets = [0, 64], sizes = [1, 32], strides = [1, 1]} : vector<1x128xf32> to vector<1x32xf32>
    %85 = math.tanh %84 : vector<1x32xf32>
    %86 = arith.mulf %82, %70 : vector<1x32xf32>
    %87 = arith.mulf %81, %85 : vector<1x32xf32>
    %88 = arith.addf %86, %87 : vector<1x32xf32>
    %89 = math.tanh %88 : vector<1x32xf32>
    %90 = arith.mulf %83, %89 : vector<1x32xf32>
    %91 = vector.extract_strided_slice %16 {offsets = [4, 0], sizes = [1, 128], strides = [1, 1]} : vector<8x128xf32> to vector<1x128xf32>
    %cst_21 = arith.constant dense<0.000000e+00> : vector<1x128xf32>
    %92 = tpu.matmul %90, %4, %cst_21 {dimension_numbers = #tpu.dot_dimension_numbers<[1], [0], [0], [1], [0, 0, 1, 1], [], []>} : vector<1x32xf32>, vector<32x128xf32>, vector<1x128xf32> -> vector<1x128xf32>
    %93 = arith.addf %91, %92 : vector<1x128xf32>
    %94 = arith.negf %93 : vector<1x128xf32>
    %95 = math.exp %94 : vector<1x128xf32>
    %cst_22 = arith.constant 1.000000e+00 : f32
    %96 = vector.broadcast %cst_22 : f32 to vector<1x128xf32>
    %97 = arith.addf %96, %95 : vector<1x128xf32>
    %98 = arith.divf %96, %97 : vector<1x128xf32>
    %99 = vector.extract_strided_slice %98 {offsets = [0, 0], sizes = [1, 32], strides = [1, 1]} : vector<1x128xf32> to vector<1x32xf32>
    %100 = vector.extract_strided_slice %98 {offsets = [0, 32], sizes = [1, 32], strides = [1, 1]} : vector<1x128xf32> to vector<1x32xf32>
    %101 = vector.extract_strided_slice %98 {offsets = [0, 96], sizes = [1, 32], strides = [1, 1]} : vector<1x128xf32> to vector<1x32xf32>
    %102 = vector.extract_strided_slice %93 {offsets = [0, 64], sizes = [1, 32], strides = [1, 1]} : vector<1x128xf32> to vector<1x32xf32>
    %103 = math.tanh %102 : vector<1x32xf32>
    %104 = arith.mulf %100, %88 : vector<1x32xf32>
    %105 = arith.mulf %99, %103 : vector<1x32xf32>
    %106 = arith.addf %104, %105 : vector<1x32xf32>
    %107 = math.tanh %106 : vector<1x32xf32>
    %108 = arith.mulf %101, %107 : vector<1x32xf32>
    %109 = vector.extract_strided_slice %16 {offsets = [5, 0], sizes = [1, 128], strides = [1, 1]} : vector<8x128xf32> to vector<1x128xf32>
    %cst_23 = arith.constant dense<0.000000e+00> : vector<1x128xf32>
    %110 = tpu.matmul %108, %4, %cst_23 {dimension_numbers = #tpu.dot_dimension_numbers<[1], [0], [0], [1], [0, 0, 1, 1], [], []>} : vector<1x32xf32>, vector<32x128xf32>, vector<1x128xf32> -> vector<1x128xf32>
    %111 = arith.addf %109, %110 : vector<1x128xf32>
    %112 = arith.negf %111 : vector<1x128xf32>
    %113 = math.exp %112 : vector<1x128xf32>
    %cst_24 = arith.constant 1.000000e+00 : f32
    %114 = vector.broadcast %cst_24 : f32 to vector<1x128xf32>
    %115 = arith.addf %114, %113 : vector<1x128xf32>
    %116 = arith.divf %114, %115 : vector<1x128xf32>
    %117 = vector.extract_strided_slice %116 {offsets = [0, 0], sizes = [1, 32], strides = [1, 1]} : vector<1x128xf32> to vector<1x32xf32>
    %118 = vector.extract_strided_slice %116 {offsets = [0, 32], sizes = [1, 32], strides = [1, 1]} : vector<1x128xf32> to vector<1x32xf32>
    %119 = vector.extract_strided_slice %116 {offsets = [0, 96], sizes = [1, 32], strides = [1, 1]} : vector<1x128xf32> to vector<1x32xf32>
    %120 = vector.extract_strided_slice %111 {offsets = [0, 64], sizes = [1, 32], strides = [1, 1]} : vector<1x128xf32> to vector<1x32xf32>
    %121 = math.tanh %120 : vector<1x32xf32>
    %122 = arith.mulf %118, %106 : vector<1x32xf32>
    %123 = arith.mulf %117, %121 : vector<1x32xf32>
    %124 = arith.addf %122, %123 : vector<1x32xf32>
    %125 = math.tanh %124 : vector<1x32xf32>
    %126 = arith.mulf %119, %125 : vector<1x32xf32>
    %127 = vector.extract_strided_slice %16 {offsets = [6, 0], sizes = [1, 128], strides = [1, 1]} : vector<8x128xf32> to vector<1x128xf32>
    %cst_25 = arith.constant dense<0.000000e+00> : vector<1x128xf32>
    %128 = tpu.matmul %126, %4, %cst_25 {dimension_numbers = #tpu.dot_dimension_numbers<[1], [0], [0], [1], [0, 0, 1, 1], [], []>} : vector<1x32xf32>, vector<32x128xf32>, vector<1x128xf32> -> vector<1x128xf32>
    %129 = arith.addf %127, %128 : vector<1x128xf32>
    %130 = arith.negf %129 : vector<1x128xf32>
    %131 = math.exp %130 : vector<1x128xf32>
    %cst_26 = arith.constant 1.000000e+00 : f32
    %132 = vector.broadcast %cst_26 : f32 to vector<1x128xf32>
    %133 = arith.addf %132, %131 : vector<1x128xf32>
    %134 = arith.divf %132, %133 : vector<1x128xf32>
    %135 = vector.extract_strided_slice %134 {offsets = [0, 0], sizes = [1, 32], strides = [1, 1]} : vector<1x128xf32> to vector<1x32xf32>
    %136 = vector.extract_strided_slice %134 {offsets = [0, 32], sizes = [1, 32], strides = [1, 1]} : vector<1x128xf32> to vector<1x32xf32>
    %137 = vector.extract_strided_slice %134 {offsets = [0, 96], sizes = [1, 32], strides = [1, 1]} : vector<1x128xf32> to vector<1x32xf32>
    %138 = vector.extract_strided_slice %129 {offsets = [0, 64], sizes = [1, 32], strides = [1, 1]} : vector<1x128xf32> to vector<1x32xf32>
    %139 = math.tanh %138 : vector<1x32xf32>
    %140 = arith.mulf %136, %124 : vector<1x32xf32>
    %141 = arith.mulf %135, %139 : vector<1x32xf32>
    %142 = arith.addf %140, %141 : vector<1x32xf32>
    %143 = math.tanh %142 : vector<1x32xf32>
    %144 = arith.mulf %137, %143 : vector<1x32xf32>
    %145 = vector.extract_strided_slice %16 {offsets = [7, 0], sizes = [1, 128], strides = [1, 1]} : vector<8x128xf32> to vector<1x128xf32>
    %cst_27 = arith.constant dense<0.000000e+00> : vector<1x128xf32>
    %146 = tpu.matmul %144, %4, %cst_27 {dimension_numbers = #tpu.dot_dimension_numbers<[1], [0], [0], [1], [0, 0, 1, 1], [], []>} : vector<1x32xf32>, vector<32x128xf32>, vector<1x128xf32> -> vector<1x128xf32>
    %147 = arith.addf %145, %146 : vector<1x128xf32>
    %148 = arith.negf %147 : vector<1x128xf32>
    %149 = math.exp %148 : vector<1x128xf32>
    %cst_28 = arith.constant 1.000000e+00 : f32
    %150 = vector.broadcast %cst_28 : f32 to vector<1x128xf32>
    %151 = arith.addf %150, %149 : vector<1x128xf32>
    %152 = arith.divf %150, %151 : vector<1x128xf32>
    %153 = vector.extract_strided_slice %152 {offsets = [0, 0], sizes = [1, 32], strides = [1, 1]} : vector<1x128xf32> to vector<1x32xf32>
    %154 = vector.extract_strided_slice %152 {offsets = [0, 32], sizes = [1, 32], strides = [1, 1]} : vector<1x128xf32> to vector<1x32xf32>
    %155 = vector.extract_strided_slice %152 {offsets = [0, 96], sizes = [1, 32], strides = [1, 1]} : vector<1x128xf32> to vector<1x32xf32>
    %156 = vector.extract_strided_slice %147 {offsets = [0, 64], sizes = [1, 32], strides = [1, 1]} : vector<1x128xf32> to vector<1x32xf32>
    %157 = math.tanh %156 : vector<1x32xf32>
    %158 = arith.mulf %154, %142 : vector<1x32xf32>
    %159 = arith.mulf %153, %157 : vector<1x32xf32>
    %160 = arith.addf %158, %159 : vector<1x32xf32>
    %161 = math.tanh %160 : vector<1x32xf32>
    %162 = arith.mulf %155, %161 : vector<1x32xf32>
    %163 = tpu.concatenate %36, %54, %72, %90, %108, %126, %144, %162 in 0 : vector<1x32xf32>, vector<1x32xf32>, vector<1x32xf32>, vector<1x32xf32>, vector<1x32xf32>, vector<1x32xf32>, vector<1x32xf32>, vector<1x32xf32> -> vector<8x32xf32>
    %164 = tpu.transpose %163, [1, 0] : vector<8x32xf32> -> vector<32x8xf32>
    %cst_29 = arith.constant dense<0.000000e+00> : vector<16x8xf32>
    %165 = tpu.matmul %5, %164, %cst_29 {dimension_numbers = #tpu.dot_dimension_numbers<[1], [0], [0], [1], [0, 0, 1, 1], [], []>} : vector<16x32xf32>, vector<32x8xf32>, vector<16x8xf32> -> vector<16x8xf32>
    %166 = vector.broadcast %6 : vector<16x1xf32> to vector<16x8xf32>
    %167 = arith.addf %165, %166 : vector<16x8xf32>
    %c0_30 = arith.constant 0 : index
    %c0_31 = arith.constant 0 : index
    %168 = vector.load %arg2[%c0_30, %c0_31] : memref<16x8xf32, #tpu.memory_space<vmem>>, vector<16x8xf32>
    tpu.vector_store %arg2[%c0_30, %c0_31], %167 {strides = array<i32>} : memref<16x8xf32, #tpu.memory_space<vmem>>, vector<16x8xf32>,
    return
  }
}

</mosaic_0001>

<llo_original>
// kernel: forward.1
$region0: #{forward.1}
  #allocation0 [shape = 'u32[]', space=smem, size = 0x4, offset = 0x4, fixed_abs, tag = 'smem constant byte address 0x4 - core index']
  #allocation1 [shape = 'u32[144,128]{1,0:T(1,128)}', space=vmem, size = 0x12000, scoped, tag = 'internal scratch']
  %s0 = inlined_call_operand.vmem [shape: f32[16,8], index: 0, kind: input, shape index: {}]
  %s1 = inlined_call_operand.hbm [shape: f32[160,128], index: 1, kind: input, shape index: {}]
  %s2 = inlined_call_operand.vmem [shape: f32[16,8], index: 2, kind: output, shape index: {}]
  %s3 = sld [smem:[#allocation0]]
  $region22: #{forward.1} parent=0
    _
  %s5 = ssub.s32 1, %s3
  %s6 = scalar_select 0, %s5, %s3
  $region1: #{forward.1} parent=0
    #allocation2 [shape = 'u8[81920]{0}', space=vmem, size = 0x14000, scoped, tag = 'input window, operand 1, single buffered']
    #allocation3 [shape = 's32[1]{0}', space=sflag, size = 0x4, scoped, tag = 'scoped memory for forward.1']
    %7 = vsyncpa [#allocation3], 0
    // Predicated region
    $region2: #{forward.1} parent=1 // pred_check
      _
    $region3: #{forward.1} parent=1 // pred_check_branch
      %9 = sbr.rel (0) target = $region5
    $region4: #{forward.1} parent=1 // pred_region
      _
    $region5: #{forward.1} parent=1 // pred_fallthru
      _
    // Predicated region
    $region6: #{forward.1} parent=1 // pred_check
      _
    $region7: #{forward.1} parent=1 // pred_check_branch
      %11 = sbr.rel (0) target = $region9
    $region8: #{forward.1} parent=1 // pred_region
      %s13 = ssub.s32 2560, 2560
      %14 = vsyncadd [#allocation3], %s13
      %s15 = sshll.u32 [#allocation2], 4
      %s16 = int_to_ptr.vmem [resolvable:$true] %s15
      %21 = dma.hbm_to_vmem [thread:$0]  %s1, 2560, %s16, [#allocation3], 128, 128, 8
    $region9: #{forward.1} parent=1 // pred_fallthru
      _
    // Predicated region
    $region10: #{forward.1} parent=1 // pred_check
      _
    $region11: #{forward.1} parent=1 // pred_check_branch
      %23 = sbr.rel (0) target = $region13
    $region12: #{forward.1} parent=1 // pred_region
      %24 = dma.done [#allocation3], 2560
    $region13: #{forward.1} parent=1 // pred_fallthru
      _
    %v25 = vld [vmem:[#allocation2] sm:$0xff]
    %v26 = vld [vmem:[#allocation2 + $0x8] sm:$0xff]
    %v27 = vld [vmem:[#allocation2 + $0x10] sm:$0x1]
    %v28 = vld [vmem:[#allocation2 + $0x18] sm:$0xff]
    %v29 = vld [vmem:[#allocation2 + $0x20] sm:$0xff]
    %v30 = vld [vmem:[#allocation2 + $0x28] sm:$0xff]
    %v31 = vld [vmem:[#allocation2 + $0x30] sm:$0xff]
    %v32 = vld [vmem:[#allocation2 + $0x38] sm:$0xff]
    %v33 = vld [vmem:[#allocation2 + $0x40] sm:$0xff]
    %v34 = vld [vmem:[#allocation2 + $0x48] sm:$0xff]
    %v35 = vld [vmem:[#allocation2 + $0x50] sm:$0xff]
    %v36 = vld [vmem:[#allocation2 + $0x58] sm:$0x1]
    %v37 = vld [vmem:[#allocation2 + $0x60] sm:$0xff]
    %v38 = vld [vmem:[#allocation2 + $0x68] sm:$0xff]
    %v39 = vld [vmem:[#allocation2 + $0x70] sm:$0xff]
    %v40 = vld [vmem:[#allocation2 + $0x78] sm:$0xff]
    %v41 = vld [vmem:[#allocation2 + $0x80] sm:$0xff]
    %v42 = vld [vmem:[#allocation2 + $0x88] sm:$0xff]
    %v43 = vld [vmem:[#allocation2 + $0x90] sm:$0xff]
    %v44 = vld [vmem:[#allocation2 + $0x98] sm:$0xff]
    %v45 = vld [vmem:[%s0] sm:$0xff]
    %v46 = vld [vmem:[%s0 + $0x8] sm:$0xff]
    %47 = vxpose.xlu0.b32.start [1/16] %v45, 128
    %48 = vxpose.xlu0.b32.cont [2/16] %v46, 128
    %49 = vxpose.xlu0.b32.cont [3/16] 0.0, 128
    %50 = vxpose.xlu0.b32.cont [4/16] 0.0, 128
    %51 = vxpose.xlu0.b32.cont [5/16] 0.0, 128
    %52 = vxpose.xlu0.b32.cont [6/16] 0.0, 128
    %53 = vxpose.xlu0.b32.cont [7/16] 0.0, 128
    %54 = vxpose.xlu0.b32.cont [8/16] 0.0, 128
    %55 = vxpose.xlu0.b32.cont [9/16] 0.0, 128
    %56 = vxpose.xlu0.b32.cont [10/16] 0.0, 128
    %57 = vxpose.xlu0.b32.cont [11/16] 0.0, 128
    %58 = vxpose.xlu0.b32.cont [12/16] 0.0, 128
    %59 = vxpose.xlu0.b32.cont [13/16] 0.0, 128
    %60 = vxpose.xlu0.b32.cont [14/16] 0.0, 128
    %61 = vxpose.xlu0.b32.cont [15/16] 0.0, 128
    %62 = vxpose.xlu0.b32.end [16/16] 0.0, 128
    %v63 = vpop.trf.xlu0
    %v64 = vpop.trf.xlu0
    %v65 = vpop.trf.xlu0
    %v66 = vpop.trf.xlu0
    %v67 = vpop.trf.xlu0
    %v68 = vpop.trf.xlu0
    %v69 = vpop.trf.xlu0
    %v70 = vpop.trf.xlu0
    %v71 = vpop.trf.xlu0
    %v72 = vpop.trf.xlu0
    %v73 = vpop.trf.xlu0
    %v74 = vpop.trf.xlu0
    %v75 = vpop.trf.xlu0
    %v76 = vpop.trf.xlu0
    %v77 = vpop.trf.xlu0
    %v78 = vpop.trf.xlu0
    %v79 = vlaneseq
    %v80 = vshrl.u32 %v79, 7
    %v81 = vsub.s32 0, %v80
    %v82 = vrot.slane %v27, %v81
    %vm83 = vcmask 130048
    %v85 = vsel %vm83, %v63, 0
    %87 = vmatprep.subr.mxu0 0.0
    %88 = vmatpush1.msra.mxu0 %v25
    %89 = vmatprep.subr.mxu0 0.0
    %90 = vmatpush1.msra.mxu0 %v26
    %91 = vmatprep.subr.mxu0 0.0
    %92 = vmatpush1.msra.mxu0 0.0
    %93 = vmatprep.subr.mxu0 0.0
    %94 = vmatpush1.msra.mxu0 0.0
    %95 = vmatprep.subr.mxu0 0.0
    %96 = vmatpush1.msra.mxu0 0.0
    %97 = vmatprep.subr.mxu0 0.0
    %98 = vmatpush1.msra.mxu0 0.0
    %99 = vmatprep.subr.mxu0 0.0
    %100 = vmatpush1.msra.mxu0 0.0
    %101 = vmatprep.subr.mxu0 0.0
    %102 = vmatpush1.msra.mxu0 0.0
    %103 = vmatprep.subr.mxu0 0.0
    %104 = vmatpush1.msra.mxu0 0.0
    %105 = vmatprep.subr.mxu0 0.0
    %106 = vmatpush1.msra.mxu0 0.0
    %107 = vmatprep.subr.mxu0 0.0
    %108 = vmatpush1.msra.mxu0 0.0
    %109 = vmatprep.subr.mxu0 0.0
    %110 = vmatpush1.msra.mxu0 0.0
    %111 = vmatprep.subr.mxu0 0.0
    %112 = vmatpush1.msra.mxu0 0.0
    %113 = vmatprep.subr.mxu0 0.0
    %114 = vmatpush1.msra.mxu0 0.0
    %115 = vmatprep.subr.mxu0 0.0
    %116 = vmatpush1.msra.mxu0 0.0
    %117 = vmatprep.subr.mxu0 0.0
    %118 = vmatpush1.msra.mxu0 0.0
    %119 = vmatprep.subr.mxu0 0.0
    %120 = vmatpush1.msra.mxu0 0.0
    %121 = vmatprep.subr.mxu0 0.0
    %122 = vmatpush1.msra.mxu0 0.0
    %123 = vmatprep.subr.mxu0 0.0
    %124 = vmatpush1.msra.mxu0 0.0
    %125 = vmatprep.subr.mxu0 0.0
    %126 = vmatpush1.msra.mxu0 0.0
    %127 = vmatprep.subr.mxu0 0.0
    %128 = vmatpush1.msra.mxu0 0.0
    %129 = vmatprep.subr.mxu0 0.0
    %130 = vmatpush1.msra.mxu0 0.0
    %131 = vmatprep.subr.mxu0 0.0
    %132 = vmatpush1.msra.mxu0 0.0
    %133 = vmatprep.subr.mxu0 0.0
    %134 = vmatpush1.msra.mxu0 0.0
    %135 = vmatprep.subr.mxu0 0.0
    %136 = vmatpush1.msra.mxu0 0.0
    %137 = vmatprep.subr.mxu0 0.0
    %138 = vmatpush1.msra.mxu0 0.0
    %139 = vmatprep.subr.mxu0 0.0
    %140 = vmatpush1.msra.mxu0 0.0
    %141 = vmatprep.subr.mxu0 0.0
    %142 = vmatpush1.msra.mxu0 0.0
    %143 = vmatprep.subr.mxu0 0.0
    %144 = vmatpush1.msra.mxu0 0.0
    %145 = vmatprep.subr.mxu0 0.0
    %146 = vmatpush1.msra.mxu0 0.0
    %147 = vmatprep.subr.mxu0 0.0
    %148 = vmatpush1.msra.mxu0 0.0
    %149 = vmatprep.subr.mxu0 0.0
    %150 = vmatpush1.msra.mxu0 0.0
    %151 = vmatprep.mubr.f32.mxu0 0.0
    %152 = vmatmul.mubr.f32.gmra.mrb[0].mxu0 %v85
    %v153 = vpop.f32.mrb[0].mxu0
    %v154 = vadd.f32 %v82, %v153
    %v155 = vpop.f32.mrb[0].mxu0
    %156 = vdwg.mxu0
    %v157 = vmax.f32 %v154, 0.0
    %v158 = vlaneseq
    %v159 = vshrl.u32 %v158, 7
    %v160 = vsub.s32 0, %v159
    %v161 = vrot.slane %v36, %v160
    %vm162 = vcmask 523264
    %v164 = vsel %vm162, %v157, 0
    %166 = vmatprep.subr.mxu0 0.0
    %167 = vmatpush1.msra.mxu0 %v28
    %168 = vmatprep.subr.mxu0 0.0
    %169 = vmatpush1.msra.mxu0 %v29
    %170 = vmatprep.subr.mxu0 0.0
    %171 = vmatpush1.msra.mxu0 %v30
    %172 = vmatprep.subr.mxu0 0.0
    %173 = vmatpush1.msra.mxu0 %v31
    %174 = vmatprep.subr.mxu0 0.0
    %175 = vmatpush1.msra.mxu0 %v32
    %176 = vmatprep.subr.mxu0 0.0
    %177 = vmatpush1.msra.mxu0 %v33
    %178 = vmatprep.subr.mxu0 0.0
    %179 = vmatpush1.msra.mxu0 %v34
    %180 = vmatprep.subr.mxu0 0.0
    %181 = vmatpush1.msra.mxu0 %v35
    %182 = vmatprep.subr.mxu0 0.0
    %183 = vmatpush1.msra.mxu0 0.0
    %184 = vmatprep.subr.mxu0 0.0
    %185 = vmatpush1.msra.mxu0 0.0
    %186 = vmatprep.subr.mxu0 0.0
    %187 = vmatpush1.msra.mxu0 0.0
    %188 = vmatprep.subr.mxu0 0.0
    %189 = vmatpush1.msra.mxu0 0.0
    %190 = vmatprep.subr.mxu0 0.0
    %191 = vmatpush1.msra.mxu0 0.0
    %192 = vmatprep.subr.mxu0 0.0
    %193 = vmatpush1.msra.mxu0 0.0
    %194 = vmatprep.subr.mxu0 0.0
    %195 = vmatpush1.msra.mxu0 0.0
    %196 = vmatprep.subr.mxu0 0.0
    %197 = vmatpush1.msra.mxu0 0.0
    %198 = vmatprep.subr.mxu0 0.0
    %199 = vmatpush1.msra.mxu0 0.0
    %200 = vmatprep.subr.mxu0 0.0
    %201 = vmatpush1.msra.mxu0 0.0
    %202 = vmatprep.subr.mxu0 0.0
    %203 = vmatpush1.msra.mxu0 0.0
    %204 = vmatprep.subr.mxu0 0.0
    %205 = vmatpush1.msra.mxu0 0.0
    %206 = vmatprep.subr.mxu0 0.0
    %207 = vmatpush1.msra.mxu0 0.0
    %208 = vmatprep.subr.mxu0 0.0
    %209 = vmatpush1.msra.mxu0 0.0
    %210 = vmatprep.subr.mxu0 0.0
    %211 = vmatpush1.msra.mxu0 0.0
    %212 = vmatprep.subr.mxu0 0.0
    %213 = vmatpush1.msra.mxu0 0.0
    %214 = vmatprep.subr.mxu0 0.0
    %215 = vmatpush1.msra.mxu0 0.0
    %216 = vmatprep.subr.mxu0 0.0
    %217 = vmatpush1.msra.mxu0 0.0
    %218 = vmatprep.subr.mxu0 0.0
    %219 = vmatpush1.msra.mxu0 0.0
    %220 = vmatprep.subr.mxu0 0.0
    %221 = vmatpush1.msra.mxu0 0.0
    %222 = vmatprep.subr.mxu0 0.0
    %223 = vmatpush1.msra.mxu0 0.0
    %224 = vmatprep.subr.mxu0 0.0
    %225 = vmatpush1.msra.mxu0 0.0
    %226 = vmatprep.subr.mxu0 0.0
    %227 = vmatpush1.msra.mxu0 0.0
    %228 = vmatprep.subr.mxu0 0.0
    %229 = vmatpush1.msra.mxu0 0.0
    %230 = vmatprep.mubr.f32.mxu0 0.0
    %231 = vmatmul.mubr.f32.gmra.mrb[0].mxu0 %v164
    %v232 = vpop.f32.mrb[0].mxu0
    %v233 = vadd.f32 %v161, %v232
    %v234 = vpop.f32.mrb[0].mxu0
    %235 = vdwg.mxu0
    %vm236 = vcmask 261120
    %v238 = vsel %vm236, 0.0, 0
    %240 = vmatprep.subr.mxu0 0.0
    %241 = vmatpush1.msra.mxu0 %v37
    %242 = vmatprep.subr.mxu0 0.0
    %243 = vmatpush1.msra.mxu0 %v38
    %244 = vmatprep.subr.mxu0 0.0
    %245 = vmatpush1.msra.mxu0 %v39
    %246 = vmatprep.subr.mxu0 0.0
    %247 = vmatpush1.msra.mxu0 %v40
    %248 = vmatprep.subr.mxu0 0.0
    %249 = vmatpush1.msra.mxu0 0.0
    %250 = vmatprep.subr.mxu0 0.0
    %251 = vmatpush1.msra.mxu0 0.0
    %252 = vmatprep.subr.mxu0 0.0
    %253 = vmatpush1.msra.mxu0 0.0
    %254 = vmatprep.subr.mxu0 0.0
    %255 = vmatpush1.msra.mxu0 0.0
    %256 = vmatprep.subr.mxu0 0.0
    %257 = vmatpush1.msra.mxu0 0.0
    %258 = vmatprep.subr.mxu0 0.0
    %259 = vmatpush1.msra.mxu0 0.0
    %260 = vmatprep.subr.mxu0 0.0
    %261 = vmatpush1.msra.mxu0 0.0
    %262 = vmatprep.subr.mxu0 0.0
    %263 = vmatpush1.msra.mxu0 0.0
    %264 = vmatprep.subr.mxu0 0.0
    %265 = vmatpush1.msra.mxu0 0.0
    %266 = vmatprep.subr.mxu0 0.0
    %267 = vmatpush1.msra.mxu0 0.0
    %268 = vmatprep.subr.mxu0 0.0
    %269 = vmatpush1.msra.mxu0 0.0
    %270 = vmatprep.subr.mxu0 0.0
    %271 = vmatpush1.msra.mxu0 0.0
    %272 = vmatprep.subr.mxu0 0.0
    %273 = vmatpush1.msra.mxu0 0.0
    %274 = vmatprep.subr.mxu0 0.0
    %275 = vmatpush1.msra.mxu0 0.0
    %276 = vmatprep.subr.mxu0 0.0
    %277 = vmatpush1.msra.mxu0 0.0
    %278 = vmatprep.subr.mxu0 0.0
    %279 = vmatpush1.msra.mxu0 0.0
    %280 = vmatprep.subr.mxu0 0.0
    %281 = vmatpush1.msra.mxu0 0.0
    %282 = vmatprep.subr.mxu0 0.0
    %283 = vmatpush1.msra.mxu0 0.0
    %284 = vmatprep.subr.mxu0 0.0
    %285 = vmatpush1.msra.mxu0 0.0
    %286 = vmatprep.subr.mxu0 0.0
    %287 = vmatpush1.msra.mxu0 0.0
    %288 = vmatprep.subr.mxu0 0.0
    %289 = vmatpush1.msra.mxu0 0.0
    %290 = vmatprep.subr.mxu0 0.0
    %291 = vmatpush1.msra.mxu0 0.0
    %292 = vmatprep.subr.mxu0 0.0
    %293 = vmatpush1.msra.mxu0 0.0
    %294 = vmatprep.subr.mxu0 0.0
    %295 = vmatpush1.msra.mxu0 0.0
    %296 = vmatprep.subr.mxu0 0.0
    %297 = vmatpush1.msra.mxu0 0.0
    %298 = vmatprep.subr.mxu0 0.0
    %299 = vmatpush1.msra.mxu0 0.0
    %300 = vmatprep.subr.mxu0 0.0
    %301 = vmatpush1.msra.mxu0 0.0
    %302 = vmatprep.subr.mxu0 0.0
    %303 = vmatpush1.msra.mxu0 0.0
    %304 = vmatprep.mubr.f32.mxu0 0.0
    %305 = vmatmul.mubr.f32.gmra.mrb[0].mxu0 %v238
    %v306 = vpop.f32.mrb[0].mxu0
    %v307 = vadd.f32 0.0, %v306
    %v308 = vpop.f32.mrb[0].mxu0
    %309 = vdwg.mxu0
    %v310 = vadd.f32 %v233, %v307
    %v311 = vxor.u32 %v310, 2147483648
    %v312 = vmul.f32 %v311, 1.442695
    %v313 = vpow.pop %v312
    %v314 = vadd.f32 %v313, 1.0
    %v315 = vrcp.pop %v314
    %v316 = vmul.f32 1.0, %v315
    %v317 = vtanh.pop %v310
    %v318 = vmul.f32 %v316, 0.0
    %320 = vrot.lane.b32.xlu0 %v317, 64
    %v321 = vpop.permute.xlu0 %320
    %v323 = vmul.f32 %v316, %v321
    %325 = vrot.lane.b32.xlu0 %v323, 32
    %v326 = vpop.permute.xlu0 %325
    %v328 = vadd.f32 %v318, %v326
    %v329 = vtanh.pop %v328
    %331 = vrot.lane.b32.xlu0 %v329, 64
    %v332 = vpop.permute.xlu0 %331
    %v334 = vmul.f32 %v316, %v332
    %336 = vrot.lane.b32.xlu0 %v334, 32
    %v337 = vpop.permute.xlu0 %336
    %v338 = vsel %vm236, %v337, 0
    %340 = vmatprep.subr.mxu0 0.0
    %341 = vmatpush1.msra.mxu0 %v37
    %342 = vmatprep.subr.mxu0 0.0
    %343 = vmatpush1.msra.mxu0 %v38
    %344 = vmatprep.subr.mxu0 0.0
    %345 = vmatpush1.msra.mxu0 %v39
    %346 = vmatprep.subr.mxu0 0.0
    %347 = vmatpush1.msra.mxu0 %v40
    %348 = vmatprep.subr.mxu0 0.0
    %349 = vmatpush1.msra.mxu0 0.0
    %350 = vmatprep.subr.mxu0 0.0
    %351 = vmatpush1.msra.mxu0 0.0
    %352 = vmatprep.subr.mxu0 0.0
    %353 = vmatpush1.msra.mxu0 0.0
    %354 = vmatprep.subr.mxu0 0.0
    %355 = vmatpush1.msra.mxu0 0.0
    %356 = vmatprep.subr.mxu0 0.0
    %357 = vmatpush1.msra.mxu0 0.0
    %358 = vmatprep.subr.mxu0 0.0
    %359 = vmatpush1.msra.mxu0 0.0
    %360 = vmatprep.subr.mxu0 0.0
    %361 = vmatpush1.msra.mxu0 0.0
    %362 = vmatprep.subr.mxu0 0.0
    %363 = vmatpush1.msra.mxu0 0.0
    %364 = vmatprep.subr.mxu0 0.0
    %365 = vmatpush1.msra.mxu0 0.0
    %366 = vmatprep.subr.mxu0 0.0
    %367 = vmatpush1.msra.mxu0 0.0
    %368 = vmatprep.subr.mxu0 0.0
    %369 = vmatpush1.msra.mxu0 0.0
    %370 = vmatprep.subr.mxu0 0.0
    %371 = vmatpush1.msra.mxu0 0.0
    %372 = vmatprep.subr.mxu0 0.0
    %373 = vmatpush1.msra.mxu0 0.0
    %374 = vmatprep.subr.mxu0 0.0
    %375 = vmatpush1.msra.mxu0 0.0
    %376 = vmatprep.subr.mxu0 0.0
    %377 = vmatpush1.msra.mxu0 0.0
    %378 = vmatprep.subr.mxu0 0.0
    %379 = vmatpush1.msra.mxu0 0.0
    %380 = vmatprep.subr.mxu0 0.0
    %381 = vmatpush1.msra.mxu0 0.0
    %382 = vmatprep.subr.mxu0 0.0
    %383 = vmatpush1.msra.mxu0 0.0
    %384 = vmatprep.subr.mxu0 0.0
    %385 = vmatpush1.msra.mxu0 0.0
    %386 = vmatprep.subr.mxu0 0.0
    %387 = vmatpush1.msra.mxu0 0.0
    %388 = vmatprep.subr.mxu0 0.0
    %389 = vmatpush1.msra.mxu0 0.0
    %390 = vmatprep.subr.mxu0 0.0
    %391 = vmatpush1.msra.mxu0 0.0
    %392 = vmatprep.subr.mxu0 0.0
    %393 = vmatpush1.msra.mxu0 0.0
    %394 = vmatprep.subr.mxu0 0.0
    %395 = vmatpush1.msra.mxu0 0.0
    %396 = vmatprep.subr.mxu0 0.0
    %397 = vmatpush1.msra.mxu0 0.0
    %398 = vmatprep.subr.mxu0 0.0
    %399 = vmatpush1.msra.mxu0 0.0
    %400 = vmatprep.subr.mxu0 0.0
    %401 = vmatpush1.msra.mxu0 0.0
    %402 = vmatprep.subr.mxu0 0.0
    %403 = vmatpush1.msra.mxu0 0.0
    %404 = vmatprep.mubr.f32.mxu0 0.0
    %405 = vmatmul.mubr.f32.gmra.mrb[0].mxu0 %v338
    %v406 = vpop.f32.mrb[0].mxu0
    %v407 = vadd.f32 0.0, %v406
    %v408 = vpop.f32.mrb[0].mxu0
    %409 = vdwg.mxu0
    %v411 = vrot.slane %v407, 7
    %v413 = vadd.f32 %v233, %v411
    %v414 = vxor.u32 %v413, 2147483648
    %v415 = vmul.f32 %v414, 1.442695
    %v416 = vpow.pop %v415
    %v417 = vadd.f32 %v416, 1.0
    %v418 = vrcp.pop %v417
    %v419 = vmul.f32 1.0, %v418
    %v420 = vtanh.pop %v413
    %v422 = vrot.slane %v328, 7
    %v424 = vmul.f32 %v419, %v422
    %426 = vrot.lane.b32.xlu0 %v420, 64
    %v427 = vpop.permute.xlu0 %426
    %v429 = vmul.f32 %v419, %v427
    %431 = vrot.lane.b32.xlu0 %v429, 32
    %v432 = vpop.permute.xlu0 %431
    %v434 = vadd.f32 %v424, %v432
    %v435 = vtanh.pop %v434
    %437 = vrot.lane.b32.xlu0 %v435, 64
    %v438 = vpop.permute.xlu0 %437
    %v440 = vmul.f32 %v419, %v438
    %v442 = vrot.slane %v440, 1
    %443 = vrot.lane.b32.xlu0 %v442, 32
    %v444 = vpop.permute.xlu0 %443
    %v445 = vsel %vm236, %v444, 0
    %447 = vmatprep.subr.mxu0 0.0
    %448 = vmatpush1.msra.mxu0 %v37
    %449 = vmatprep.subr.mxu0 0.0
    %450 = vmatpush1.msra.mxu0 %v38
    %451 = vmatprep.subr.mxu0 0.0
    %452 = vmatpush1.msra.mxu0 %v39
    %453 = vmatprep.subr.mxu0 0.0
    %454 = vmatpush1.msra.mxu0 %v40
    %455 = vmatprep.subr.mxu0 0.0
    %456 = vmatpush1.msra.mxu0 0.0
    %457 = vmatprep.subr.mxu0 0.0
    %458 = vmatpush1.msra.mxu0 0.0
    %459 = vmatprep.subr.mxu0 0.0
    %460 = vmatpush1.msra.mxu0 0.0
    %461 = vmatprep.subr.mxu0 0.0
    %462 = vmatpush1.msra.mxu0 0.0
    %463 = vmatprep.subr.mxu0 0.0
    %464 = vmatpush1.msra.mxu0 0.0
    %465 = vmatprep.subr.mxu0 0.0
    %466 = vmatpush1.msra.mxu0 0.0
    %467 = vmatprep.subr.mxu0 0.0
    %468 = vmatpush1.msra.mxu0 0.0
    %469 = vmatprep.subr.mxu0 0.0
    %470 = vmatpush1.msra.mxu0 0.0
    %471 = vmatprep.subr.mxu0 0.0
    %472 = vmatpush1.msra.mxu0 0.0
    %473 = vmatprep.subr.mxu0 0.0
    %474 = vmatpush1.msra.mxu0 0.0
    %475 = vmatprep.subr.mxu0 0.0
    %476 = vmatpush1.msra.mxu0 0.0
    %477 = vmatprep.subr.mxu0 0.0
    %478 = vmatpush1.msra.mxu0 0.0
    %479 = vmatprep.subr.mxu0 0.0
    %480 = vmatpush1.msra.mxu0 0.0
    %481 = vmatprep.subr.mxu0 0.0
    %482 = vmatpush1.msra.mxu0 0.0
    %483 = vmatprep.subr.mxu0 0.0
    %484 = vmatpush1.msra.mxu0 0.0
    %485 = vmatprep.subr.mxu0 0.0
    %486 = vmatpush1.msra.mxu0 0.0
    %487 = vmatprep.subr.mxu0 0.0
    %488 = vmatpush1.msra.mxu0 0.0
    %489 = vmatprep.subr.mxu0 0.0
    %490 = vmatpush1.msra.mxu0 0.0
    %491 = vmatprep.subr.mxu0 0.0
    %492 = vmatpush1.msra.mxu0 0.0
    %493 = vmatprep.subr.mxu0 0.0
    %494 = vmatpush1.msra.mxu0 0.0
    %495 = vmatprep.subr.mxu0 0.0
    %496 = vmatpush1.msra.mxu0 0.0
    %497 = vmatprep.subr.mxu0 0.0
    %498 = vmatpush1.msra.mxu0 0.0
    %499 = vmatprep.subr.mxu0 0.0
    %500 = vmatpush1.msra.mxu0 0.0
    %501 = vmatprep.subr.mxu0 0.0
    %502 = vmatpush1.msra.mxu0 0.0
    %503 = vmatprep.subr.mxu0 0.0
    %504 = vmatpush1.msra.mxu0 0.0
    %505 = vmatprep.subr.mxu0 0.0
    %506 = vmatpush1.msra.mxu0 0.0
    %507 = vmatprep.subr.mxu0 0.0
    %508 = vmatpush1.msra.mxu0 0.0
    %509 = vmatprep.subr.mxu0 0.0
    %510 = vmatpush1.msra.mxu0 0.0
    %511 = vmatprep.mubr.f32.mxu0 0.0
    %512 = vmatmul.mubr.f32.gmra.mrb[0].mxu0 %v445
    %v513 = vpop.f32.mrb[0].mxu0
    %v514 = vadd.f32 0.0, %v513
    %v515 = vpop.f32.mrb[0].mxu0
    %516 = vdwg.mxu0
    %v518 = vrot.slane %v514, 6
    %v520 = vadd.f32 %v233, %v518
    %v521 = vxor.u32 %v520, 2147483648
    %v522 = vmul.f32 %v521, 1.442695
    %v523 = vpow.pop %v522
    %v524 = vadd.f32 %v523, 1.0
    %v525 = vrcp.pop %v524
    %v526 = vmul.f32 1.0, %v525
    %v527 = vtanh.pop %v520
    %v529 = vrot.slane %v434, 7
    %v531 = vmul.f32 %v526, %v529
    %533 = vrot.lane.b32.xlu0 %v527, 64
    %v534 = vpop.permute.xlu0 %533
    %v536 = vmul.f32 %v526, %v534
    %538 = vrot.lane.b32.xlu0 %v536, 32
    %v539 = vpop.permute.xlu0 %538
    %v541 = vadd.f32 %v531, %v539
    %v542 = vtanh.pop %v541
    %544 = vrot.lane.b32.xlu0 %v542, 64
    %v545 = vpop.permute.xlu0 %544
    %v547 = vmul.f32 %v526, %v545
    %v549 = vrot.slane %v547, 2
    %550 = vrot.lane.b32.xlu0 %v549, 32
    %v551 = vpop.permute.xlu0 %550
    %v552 = vsel %vm236, %v551, 0
    %554 = vmatprep.subr.mxu0 0.0
    %555 = vmatpush1.msra.mxu0 %v37
    %556 = vmatprep.subr.mxu0 0.0
    %557 = vmatpush1.msra.mxu0 %v38
    %558 = vmatprep.subr.mxu0 0.0
    %559 = vmatpush1.msra.mxu0 %v39
    %560 = vmatprep.subr.mxu0 0.0
    %561 = vmatpush1.msra.mxu0 %v40
    %562 = vmatprep.subr.mxu0 0.0
    %563 = vmatpush1.msra.mxu0 0.0
    %564 = vmatprep.subr.mxu0 0.0
    %565 = vmatpush1.msra.mxu0 0.0
    %566 = vmatprep.subr.mxu0 0.0
    %567 = vmatpush1.msra.mxu0 0.0
    %568 = vmatprep.subr.mxu0 0.0
    %569 = vmatpush1.msra.mxu0 0.0
    %570 = vmatprep.subr.mxu0 0.0
    %571 = vmatpush1.msra.mxu0 0.0
    %572 = vmatprep.subr.mxu0 0.0
    %573 = vmatpush1.msra.mxu0 0.0
    %574 = vmatprep.subr.mxu0 0.0
    %575 = vmatpush1.msra.mxu0 0.0
    %576 = vmatprep.subr.mxu0 0.0
    %577 = vmatpush1.msra.mxu0 0.0
    %578 = vmatprep.subr.mxu0 0.0
    %579 = vmatpush1.msra.mxu0 0.0
    %580 = vmatprep.subr.mxu0 0.0
    %581 = vmatpush1.msra.mxu0 0.0
    %582 = vmatprep.subr.mxu0 0.0
    %583 = vmatpush1.msra.mxu0 0.0
    %584 = vmatprep.subr.mxu0 0.0
    %585 = vmatpush1.msra.mxu0 0.0
    %586 = vmatprep.subr.mxu0 0.0
    %587 = vmatpush1.msra.mxu0 0.0
    %588 = vmatprep.subr.mxu0 0.0
    %589 = vmatpush1.msra.mxu0 0.0
    %590 = vmatprep.subr.mxu0 0.0
    %591 = vmatpush1.msra.mxu0 0.0
    %592 = vmatprep.subr.mxu0 0.0
    %593 = vmatpush1.msra.mxu0 0.0
    %594 = vmatprep.subr.mxu0 0.0
    %595 = vmatpush1.msra.mxu0 0.0
    %596 = vmatprep.subr.mxu0 0.0
    %597 = vmatpush1.msra.mxu0 0.0
    %598 = vmatprep.subr.mxu0 0.0
    %599 = vmatpush1.msra.mxu0 0.0
    %600 = vmatprep.subr.mxu0 0.0
    %601 = vmatpush1.msra.mxu0 0.0
    %602 = vmatprep.subr.mxu0 0.0
    %603 = vmatpush1.msra.mxu0 0.0
    %604 = vmatprep.subr.mxu0 0.0
    %605 = vmatpush1.msra.mxu0 0.0
    %606 = vmatprep.subr.mxu0 0.0
    %607 = vmatpush1.msra.mxu0 0.0
    %608 = vmatprep.subr.mxu0 0.0
    %609 = vmatpush1.msra.mxu0 0.0
    %610 = vmatprep.subr.mxu0 0.0
    %611 = vmatpush1.msra.mxu0 0.0
    %612 = vmatprep.subr.mxu0 0.0
    %613 = vmatpush1.msra.mxu0 0.0
    %614 = vmatprep.subr.mxu0 0.0
    %615 = vmatpush1.msra.mxu0 0.0
    %616 = vmatprep.subr.mxu0 0.0
    %617 = vmatpush1.msra.mxu0 0.0
    %618 = vmatprep.mubr.f32.mxu0 0.0
    %619 = vmatmul.mubr.f32.gmra.mrb[0].mxu0 %v552
    %v620 = vpop.f32.mrb[0].mxu0
    %v621 = vadd.f32 0.0, %v620
    %v622 = vpop.f32.mrb[0].mxu0
    %623 = vdwg.mxu0
    %v625 = vrot.slane %v621, 5
    %v627 = vadd.f32 %v233, %v625
    %v628 = vxor.u32 %v627, 2147483648
    %v629 = vmul.f32 %v628, 1.442695
    %v630 = vpow.pop %v629
    %v631 = vadd.f32 %v630, 1.0
    %v632 = vrcp.pop %v631
    %v633 = vmul.f32 1.0, %v632
    %v634 = vtanh.pop %v627
    %v636 = vrot.slane %v541, 7
    %v638 = vmul.f32 %v633, %v636
    %640 = vrot.lane.b32.xlu0 %v634, 64
    %v641 = vpop.permute.xlu0 %640
    %v643 = vmul.f32 %v633, %v641
    %645 = vrot.lane.b32.xlu0 %v643, 32
    %v646 = vpop.permute.xlu0 %645
    %v648 = vadd.f32 %v638, %v646
    %v649 = vtanh.pop %v648
    %651 = vrot.lane.b32.xlu0 %v649, 64
    %v652 = vpop.permute.xlu0 %651
    %v654 = vmul.f32 %v633, %v652
    %v656 = vrot.slane %v654, 3
    %657 = vrot.lane.b32.xlu0 %v656, 32
    %v658 = vpop.permute.xlu0 %657
    %v659 = vsel %vm236, %v658, 0
    %661 = vmatprep.subr.mxu0 0.0
    %662 = vmatpush1.msra.mxu0 %v37
    %663 = vmatprep.subr.mxu0 0.0
    %664 = vmatpush1.msra.mxu0 %v38
    %665 = vmatprep.subr.mxu0 0.0
    %666 = vmatpush1.msra.mxu0 %v39
    %667 = vmatprep.subr.mxu0 0.0
    %668 = vmatpush1.msra.mxu0 %v40
    %669 = vmatprep.subr.mxu0 0.0
    %670 = vmatpush1.msra.mxu0 0.0
    %671 = vmatprep.subr.mxu0 0.0
    %672 = vmatpush1.msra.mxu0 0.0
    %673 = vmatprep.subr.mxu0 0.0
    %674 = vmatpush1.msra.mxu0 0.0
    %675 = vmatprep.subr.mxu0 0.0
    %676 = vmatpush1.msra.mxu0 0.0
    %677 = vmatprep.subr.mxu0 0.0
    %678 = vmatpush1.msra.mxu0 0.0
    %679 = vmatprep.subr.mxu0 0.0
    %680 = vmatpush1.msra.mxu0 0.0
    %681 = vmatprep.subr.mxu0 0.0
    %682 = vmatpush1.msra.mxu0 0.0
    %683 = vmatprep.subr.mxu0 0.0
    %684 = vmatpush1.msra.mxu0 0.0
    %685 = vmatprep.subr.mxu0 0.0
    %686 = vmatpush1.msra.mxu0 0.0
    %687 = vmatprep.subr.mxu0 0.0
    %688 = vmatpush1.msra.mxu0 0.0
    %689 = vmatprep.subr.mxu0 0.0
    %690 = vmatpush1.msra.mxu0 0.0
    %691 = vmatprep.subr.mxu0 0.0
    %692 = vmatpush1.msra.mxu0 0.0
    %693 = vmatprep.subr.mxu0 0.0
    %694 = vmatpush1.msra.mxu0 0.0
    %695 = vmatprep.subr.mxu0 0.0
    %696 = vmatpush1.msra.mxu0 0.0
    %697 = vmatprep.subr.mxu0 0.0
    %698 = vmatpush1.msra.mxu0 0.0
    %699 = vmatprep.subr.mxu0 0.0
    %700 = vmatpush1.msra.mxu0 0.0
    %701 = vmatprep.subr.mxu0 0.0
    %702 = vmatpush1.msra.mxu0 0.0
    %703 = vmatprep.subr.mxu0 0.0
    %704 = vmatpush1.msra.mxu0 0.0
    %705 = vmatprep.subr.mxu0 0.0
    %706 = vmatpush1.msra.mxu0 0.0
    %707 = vmatprep.subr.mxu0 0.0
    %708 = vmatpush1.msra.mxu0 0.0
    %709 = vmatprep.subr.mxu0 0.0
    %710 = vmatpush1.msra.mxu0 0.0
    %711 = vmatprep.subr.mxu0 0.0
    %712 = vmatpush1.msra.mxu0 0.0
    %713 = vmatprep.subr.mxu0 0.0
    %714 = vmatpush1.msra.mxu0 0.0
    %715 = vmatprep.subr.mxu0 0.0
    %716 = vmatpush1.msra.mxu0 0.0
    %717 = vmatprep.subr.mxu0 0.0
    %718 = vmatpush1.msra.mxu0 0.0
    %719 = vmatprep.subr.mxu0 0.0
    %720 = vmatpush1.msra.mxu0 0.0
    %721 = vmatprep.subr.mxu0 0.0
    %722 = vmatpush1.msra.mxu0 0.0
    %723 = vmatprep.subr.mxu0 0.0
    %724 = vmatpush1.msra.mxu0 0.0
    %725 = vmatprep.mubr.f32.mxu0 0.0
    %726 = vmatmul.mubr.f32.gmra.mrb[0].mxu0 %v659
    %v727 = vpop.f32.mrb[0].mxu0
    %v728 = vadd.f32 0.0, %v727
    %v729 = vpop.f32.mrb[0].mxu0
    %730 = vdwg.mxu0
    %v732 = vrot.slane %v728, 4
    %v734 = vadd.f32 %v233, %v732
    %v735 = vxor.u32 %v734, 2147483648
    %v736 = vmul.f32 %v735, 1.442695
    %v737 = vpow.pop %v736
    %v738 = vadd.f32 %v737, 1.0
    %v739 = vrcp.pop %v738
    %v740 = vmul.f32 1.0, %v739
    %v741 = vtanh.pop %v734
    %v743 = vrot.slane %v648, 7
    %v745 = vmul.f32 %v740, %v743
    %747 = vrot.lane.b32.xlu0 %v741, 64
    %v748 = vpop.permute.xlu0 %747
    %v750 = vmul.f32 %v740, %v748
    %752 = vrot.lane.b32.xlu0 %v750, 32
    %v753 = vpop.permute.xlu0 %752
    %v755 = vadd.f32 %v745, %v753
    %v756 = vtanh.pop %v755
    %758 = vrot.lane.b32.xlu0 %v756, 64
    %v759 = vpop.permute.xlu0 %758
    %v761 = vmul.f32 %v740, %v759
    %v763 = vrot.slane %v761, 4
    %764 = vrot.lane.b32.xlu0 %v763, 32
    %v765 = vpop.permute.xlu0 %764
    %v766 = vsel %vm236, %v765, 0
    %768 = vmatprep.subr.mxu0 0.0
    %769 = vmatpush1.msra.mxu0 %v37
    %770 = vmatprep.subr.mxu0 0.0
    %771 = vmatpush1.msra.mxu0 %v38
    %772 = vmatprep.subr.mxu0 0.0
    %773 = vmatpush1.msra.mxu0 %v39
    %774 = vmatprep.subr.mxu0 0.0
    %775 = vmatpush1.msra.mxu0 %v40
    %776 = vmatprep.subr.mxu0 0.0
    %777 = vmatpush1.msra.mxu0 0.0
    %778 = vmatprep.subr.mxu0 0.0
    %779 = vmatpush1.msra.mxu0 0.0
    %780 = vmatprep.subr.mxu0 0.0
    %781 = vmatpush1.msra.mxu0 0.0
    %782 = vmatprep.subr.mxu0 0.0
    %783 = vmatpush1.msra.mxu0 0.0
    %784 = vmatprep.subr.mxu0 0.0
    %785 = vmatpush1.msra.mxu0 0.0
    %786 = vmatprep.subr.mxu0 0.0
    %787 = vmatpush1.msra.mxu0 0.0
    %788 = vmatprep.subr.mxu0 0.0
    %789 = vmatpush1.msra.mxu0 0.0
    %790 = vmatprep.subr.mxu0 0.0
    %791 = vmatpush1.msra.mxu0 0.0
    %792 = vmatprep.subr.mxu0 0.0
    %793 = vmatpush1.msra.mxu0 0.0
    %794 = vmatprep.subr.mxu0 0.0
    %795 = vmatpush1.msra.mxu0 0.0
    %796 = vmatprep.subr.mxu0 0.0
    %797 = vmatpush1.msra.mxu0 0.0
    %798 = vmatprep.subr.mxu0 0.0
    %799 = vmatpush1.msra.mxu0 0.0
    %800 = vmatprep.subr.mxu0 0.0
    %801 = vmatpush1.msra.mxu0 0.0
    %802 = vmatprep.subr.mxu0 0.0
    %803 = vmatpush1.msra.mxu0 0.0
    %804 = vmatprep.subr.mxu0 0.0
    %805 = vmatpush1.msra.mxu0 0.0
    %806 = vmatprep.subr.mxu0 0.0
    %807 = vmatpush1.msra.mxu0 0.0
    %808 = vmatprep.subr.mxu0 0.0
    %809 = vmatpush1.msra.mxu0 0.0
    %810 = vmatprep.subr.mxu0 0.0
    %811 = vmatpush1.msra.mxu0 0.0
    %812 = vmatprep.subr.mxu0 0.0
    %813 = vmatpush1.msra.mxu0 0.0
    %814 = vmatprep.subr.mxu0 0.0
    %815 = vmatpush1.msra.mxu0 0.0
    %816 = vmatprep.subr.mxu0 0.0
    %817 = vmatpush1.msra.mxu0 0.0
    %818 = vmatprep.subr.mxu0 0.0
    %819 = vmatpush1.msra.mxu0 0.0
    %820 = vmatprep.subr.mxu0 0.0
    %821 = vmatpush1.msra.mxu0 0.0
    %822 = vmatprep.subr.mxu0 0.0
    %823 = vmatpush1.msra.mxu0 0.0
    %824 = vmatprep.subr.mxu0 0.0
    %825 = vmatpush1.msra.mxu0 0.0
    %826 = vmatprep.subr.mxu0 0.0
    %827 = vmatpush1.msra.mxu0 0.0
    %828 = vmatprep.subr.mxu0 0.0
    %829 = vmatpush1.msra.mxu0 0.0
    %830 = vmatprep.subr.mxu0 0.0
    %831 = vmatpush1.msra.mxu0 0.0
    %832 = vmatprep.mubr.f32.mxu0 0.0
    %833 = vmatmul.mubr.f32.gmra.mrb[0].mxu0 %v766
    %v834 = vpop.f32.mrb[0].mxu0
    %v835 = vadd.f32 0.0, %v834
    %v836 = vpop.f32.mrb[0].mxu0
    %837 = vdwg.mxu0
    %v839 = vrot.slane %v835, 3
    %v841 = vadd.f32 %v233, %v839
    %v842 = vxor.u32 %v841, 2147483648
    %v843 = vmul.f32 %v842, 1.442695
    %v844 = vpow.pop %v843
    %v845 = vadd.f32 %v844, 1.0
    %v846 = vrcp.pop %v845
    %v847 = vmul.f32 1.0, %v846
    %v848 = vtanh.pop %v841
    %v850 = vrot.slane %v755, 7
    %v852 = vmul.f32 %v847, %v850
    %854 = vrot.lane.b32.xlu0 %v848, 64
    %v855 = vpop.permute.xlu0 %854
    %v857 = vmul.f32 %v847, %v855
    %859 = vrot.lane.b32.xlu0 %v857, 32
    %v860 = vpop.permute.xlu0 %859
    %v862 = vadd.f32 %v852, %v860
    %v863 = vtanh.pop %v862
    %865 = vrot.lane.b32.xlu0 %v863, 64
    %v866 = vpop.permute.xlu0 %865
    %v868 = vmul.f32 %v847, %v866
    %v870 = vrot.slane %v868, 5
    %871 = vrot.lane.b32.xlu0 %v870, 32
    %v872 = vpop.permute.xlu0 %871
    %v873 = vsel %vm236, %v872, 0
    %875 = vmatprep.subr.mxu0 0.0
    %876 = vmatpush1.msra.mxu0 %v37
    %877 = vmatprep.subr.mxu0 0.0
    %878 = vmatpush1.msra.mxu0 %v38
    %879 = vmatprep.subr.mxu0 0.0
    %880 = vmatpush1.msra.mxu0 %v39
    %881 = vmatprep.subr.mxu0 0.0
    %882 = vmatpush1.msra.mxu0 %v40
    %883 = vmatprep.subr.mxu0 0.0
    %884 = vmatpush1.msra.mxu0 0.0
    %885 = vmatprep.subr.mxu0 0.0
    %886 = vmatpush1.msra.mxu0 0.0
    %887 = vmatprep.subr.mxu0 0.0
    %888 = vmatpush1.msra.mxu0 0.0
    %889 = vmatprep.subr.mxu0 0.0
    %890 = vmatpush1.msra.mxu0 0.0
    %891 = vmatprep.subr.mxu0 0.0
    %892 = vmatpush1.msra.mxu0 0.0
    %893 = vmatprep.subr.mxu0 0.0
    %894 = vmatpush1.msra.mxu0 0.0
    %895 = vmatprep.subr.mxu0 0.0
    %896 = vmatpush1.msra.mxu0 0.0
    %897 = vmatprep.subr.mxu0 0.0
    %898 = vmatpush1.msra.mxu0 0.0
    %899 = vmatprep.subr.mxu0 0.0
    %900 = vmatpush1.msra.mxu0 0.0
    %901 = vmatprep.subr.mxu0 0.0
    %902 = vmatpush1.msra.mxu0 0.0
    %903 = vmatprep.subr.mxu0 0.0
    %904 = vmatpush1.msra.mxu0 0.0
    %905 = vmatprep.subr.mxu0 0.0
    %906 = vmatpush1.msra.mxu0 0.0
    %907 = vmatprep.subr.mxu0 0.0
    %908 = vmatpush1.msra.mxu0 0.0
    %909 = vmatprep.subr.mxu0 0.0
    %910 = vmatpush1.msra.mxu0 0.0
    %911 = vmatprep.subr.mxu0 0.0
    %912 = vmatpush1.msra.mxu0 0.0
    %913 = vmatprep.subr.mxu0 0.0
    %914 = vmatpush1.msra.mxu0 0.0
    %915 = vmatprep.subr.mxu0 0.0
    %916 = vmatpush1.msra.mxu0 0.0
    %917 = vmatprep.subr.mxu0 0.0
    %918 = vmatpush1.msra.mxu0 0.0
    %919 = vmatprep.subr.mxu0 0.0
    %920 = vmatpush1.msra.mxu0 0.0
    %921 = vmatprep.subr.mxu0 0.0
    %922 = vmatpush1.msra.mxu0 0.0
    %923 = vmatprep.subr.mxu0 0.0
    %924 = vmatpush1.msra.mxu0 0.0
    %925 = vmatprep.subr.mxu0 0.0
    %926 = vmatpush1.msra.mxu0 0.0
    %927 = vmatprep.subr.mxu0 0.0
    %928 = vmatpush1.msra.mxu0 0.0
    %929 = vmatprep.subr.mxu0 0.0
    %930 = vmatpush1.msra.mxu0 0.0
    %931 = vmatprep.subr.mxu0 0.0
    %932 = vmatpush1.msra.mxu0 0.0
    %933 = vmatprep.subr.mxu0 0.0
    %934 = vmatpush1.msra.mxu0 0.0
    %935 = vmatprep.subr.mxu0 0.0
    %936 = vmatpush1.msra.mxu0 0.0
    %937 = vmatprep.subr.mxu0 0.0
    %938 = vmatpush1.msra.mxu0 0.0
    %939 = vmatprep.mubr.f32.mxu0 0.0
    %940 = vmatmul.mubr.f32.gmra.mrb[0].mxu0 %v873
    %v941 = vpop.f32.mrb[0].mxu0
    %v942 = vadd.f32 0.0, %v941
    %v943 = vpop.f32.mrb[0].mxu0
    %944 = vdwg.mxu0
    %v946 = vrot.slane %v942, 2
    %v948 = vadd.f32 %v233, %v946
    %v949 = vxor.u32 %v948, 2147483648
    %v950 = vmul.f32 %v949, 1.442695
    %v951 = vpow.pop %v950
    %v952 = vadd.f32 %v951, 1.0
    %v953 = vrcp.pop %v952
    %v954 = vmul.f32 1.0, %v953
    %v955 = vtanh.pop %v948
    %v957 = vrot.slane %v862, 7
    %v959 = vmul.f32 %v954, %v957
    %961 = vrot.lane.b32.xlu0 %v955, 64
    %v962 = vpop.permute.xlu0 %961
    %v964 = vmul.f32 %v954, %v962
    %966 = vrot.lane.b32.xlu0 %v964, 32
    %v967 = vpop.permute.xlu0 %966
    %v969 = vadd.f32 %v959, %v967
    %v970 = vtanh.pop %v969
    %972 = vrot.lane.b32.xlu0 %v970, 64
    %v973 = vpop.permute.xlu0 %972
    %v975 = vmul.f32 %v954, %v973
    %v977 = vrot.slane %v975, 6
    %978 = vrot.lane.b32.xlu0 %v977, 32
    %v979 = vpop.permute.xlu0 %978
    %v980 = vsel %vm236, %v979, 0
    %982 = vmatprep.subr.mxu0 0.0
    %983 = vmatpush1.msra.mxu0 %v37
    %984 = vmatprep.subr.mxu0 0.0
    %985 = vmatpush1.msra.mxu0 %v38
    %986 = vmatprep.subr.mxu0 0.0
    %987 = vmatpush1.msra.mxu0 %v39
    %988 = vmatprep.subr.mxu0 0.0
    %989 = vmatpush1.msra.mxu0 %v40
    %990 = vmatprep.subr.mxu0 0.0
    %991 = vmatpush1.msra.mxu0 0.0
    %992 = vmatprep.subr.mxu0 0.0
    %993 = vmatpush1.msra.mxu0 0.0
    %994 = vmatprep.subr.mxu0 0.0
    %995 = vmatpush1.msra.mxu0 0.0
    %996 = vmatprep.subr.mxu0 0.0
    %997 = vmatpush1.msra.mxu0 0.0
    %998 = vmatprep.subr.mxu0 0.0
    %999 = vmatpush1.msra.mxu0 0.0
    %1000 = vmatprep.subr.mxu0 0.0
    %1001 = vmatpush1.msra.mxu0 0.0
    %1002 = vmatprep.subr.mxu0 0.0
    %1003 = vmatpush1.msra.mxu0 0.0
    %1004 = vmatprep.subr.mxu0 0.0
    %1005 = vmatpush1.msra.mxu0 0.0
    %1006 = vmatprep.subr.mxu0 0.0
    %1007 = vmatpush1.msra.mxu0 0.0
    %1008 = vmatprep.subr.mxu0 0.0
    %1009 = vmatpush1.msra.mxu0 0.0
    %1010 = vmatprep.subr.mxu0 0.0
    %1011 = vmatpush1.msra.mxu0 0.0
    %1012 = vmatprep.subr.mxu0 0.0
    %1013 = vmatpush1.msra.mxu0 0.0
    %1014 = vmatprep.subr.mxu0 0.0
    %1015 = vmatpush1.msra.mxu0 0.0
    %1016 = vmatprep.subr.mxu0 0.0
    %1017 = vmatpush1.msra.mxu0 0.0
    %1018 = vmatprep.subr.mxu0 0.0
    %1019 = vmatpush1.msra.mxu0 0.0
    %1020 = vmatprep.subr.mxu0 0.0
    %1021 = vmatpush1.msra.mxu0 0.0
    %1022 = vmatprep.subr.mxu0 0.0
    %1023 = vmatpush1.msra.mxu0 0.0
    %1024 = vmatprep.subr.mxu0 0.0
    %1025 = vmatpush1.msra.mxu0 0.0
    %1026 = vmatprep.subr.mxu0 0.0
    %1027 = vmatpush1.msra.mxu0 0.0
    %1028 = vmatprep.subr.mxu0 0.0
    %1029 = vmatpush1.msra.mxu0 0.0
    %1030 = vmatprep.subr.mxu0 0.0
    %1031 = vmatpush1.msra.mxu0 0.0
    %1032 = vmatprep.subr.mxu0 0.0
    %1033 = vmatpush1.msra.mxu0 0.0
    %1034 = vmatprep.subr.mxu0 0.0
    %1035 = vmatpush1.msra.mxu0 0.0
    %1036 = vmatprep.subr.mxu0 0.0
    %1037 = vmatpush1.msra.mxu0 0.0
    %1038 = vmatprep.subr.mxu0 0.0
    %1039 = vmatpush1.msra.mxu0 0.0
    %1040 = vmatprep.subr.mxu0 0.0
    %1041 = vmatpush1.msra.mxu0 0.0
    %1042 = vmatprep.subr.mxu0 0.0
    %1043 = vmatpush1.msra.mxu0 0.0
    %1044 = vmatprep.subr.mxu0 0.0
    %1045 = vmatpush1.msra.mxu0 0.0
    %1046 = vmatprep.mubr.f32.mxu0 0.0
    %1047 = vmatmul.mubr.f32.gmra.mrb[0].mxu0 %v980
    %v1048 = vpop.f32.mrb[0].mxu0
    %v1049 = vadd.f32 0.0, %v1048
    %v1050 = vpop.f32.mrb[0].mxu0
    %1051 = vdwg.mxu0
    %v1053 = vrot.slane %v1049, 1
    %v1055 = vadd.f32 %v233, %v1053
    %v1056 = vxor.u32 %v1055, 2147483648
    %v1057 = vmul.f32 %v1056, 1.442695
    %v1058 = vpow.pop %v1057
    %v1059 = vadd.f32 %v1058, 1.0
    %v1060 = vrcp.pop %v1059
    %v1061 = vmul.f32 1.0, %v1060
    %v1062 = vtanh.pop %v1055
    %v1064 = vrot.slane %v969, 7
    %v1066 = vmul.f32 %v1061, %v1064
    %1068 = vrot.lane.b32.xlu0 %v1062, 64
    %v1069 = vpop.permute.xlu0 %1068
    %v1071 = vmul.f32 %v1061, %v1069
    %1073 = vrot.lane.b32.xlu0 %v1071, 32
    %v1074 = vpop.permute.xlu0 %1073
    %v1076 = vadd.f32 %v1066, %v1074
    %v1077 = vtanh.pop %v1076
    %1079 = vrot.lane.b32.xlu0 %v1077, 64
    %v1080 = vpop.permute.xlu0 %1079
    %v1082 = vmul.f32 %v1061, %v1080
    %vm1083 = vcmask 1040384
    %v1084 = vsel %vm1083, %v334, %v440
    %vm1085 = vcmask 1041408
    %v1086 = vsel %vm1085, %v1084, %v547
    %vm1087 = vcmask 1042432
    %v1088 = vsel %vm1087, %v1086, %v654
    %vm1089 = vcmask 1043456
    %v1090 = vsel %vm1089, %v1088, %v761
    %vm1091 = vcmask 1044480
    %v1092 = vsel %vm1091, %v1090, %v868
    %vm1093 = vcmask 1045504
    %v1094 = vsel %vm1093, %v1092, %v975
    %vm1095 = vcmask 1046528
    %v1096 = vsel %vm1095, %v1094, %v1082
    %1098 = vset.pattern.permute.xlu0 0
    %1099 = vperm.xlu0 %1098, %v43
    %v1100 = vpop.permute.xlu0 %1099
    %1103 = vset.pattern.permute.xlu0 0
    %1104 = vperm.xlu0 %1103, %v44
    %v1105 = vpop.permute.xlu0 %1104
    %1108 = vrot.lane.b32.xlu0 %v1096, 32
    %v1109 = vpop.permute.xlu0 %1108
    %v1111 = vsel %vm236, %v41, 0
    %v1114 = vsel %vm236, %v42, 0
    %v1116 = vsel %vm236, %v1109, 0
    %1118 = vmatprep.subr.mxu0 0.0
    %1119 = vmatpush1.xpose.msra.mxu0 %v1116
    %1120 = vmatprep.subr.mxu0 0.0
    %1121 = vmatpush1.xpose.msra.mxu0 0.0
    %1122 = vmatprep.subr.mxu0 0.0
    %1123 = vmatpush1.xpose.msra.mxu0 0.0
    %1124 = vmatprep.subr.mxu0 0.0
    %1125 = vmatpush1.xpose.msra.mxu0 0.0
    %1126 = vmatprep.subr.mxu0 0.0
    %1127 = vmatpush1.xpose.msra.mxu0 0.0
    %1128 = vmatprep.subr.mxu0 0.0
    %1129 = vmatpush1.xpose.msra.mxu0 0.0
    %1130 = vmatprep.subr.mxu0 0.0
    %1131 = vmatpush1.xpose.msra.mxu0 0.0
    %1132 = vmatprep.subr.mxu0 0.0
    %1133 = vmatpush1.xpose.msra.mxu0 0.0
    %1134 = vmatprep.subr.mxu0 0.0
    %1135 = vmatpush1.xpose.msra.mxu0 0.0
    %1136 = vmatprep.subr.mxu0 0.0
    %1137 = vmatpush1.xpose.msra.mxu0 0.0
    %1138 = vmatprep.subr.mxu0 0.0
    %1139 = vmatpush1.xpose.msra.mxu0 0.0
    %1140 = vmatprep.subr.mxu0 0.0
    %1141 = vmatpush1.xpose.msra.mxu0 0.0
    %1142 = vmatprep.subr.mxu0 0.0
    %1143 = vmatpush1.xpose.msra.mxu0 0.0
    %1144 = vmatprep.subr.mxu0 0.0
    %1145 = vmatpush1.xpose.msra.mxu0 0.0
    %1146 = vmatprep.subr.mxu0 0.0
    %1147 = vmatpush1.xpose.msra.mxu0 0.0
    %1148 = vmatprep.subr.mxu0 0.0
    %1149 = vmatpush1.xpose.msra.mxu0 0.0
    %1150 = vmatprep.subr.mxu0 0.0
    %1151 = vmatpush1.xpose.msra.mxu0 0.0
    %1152 = vmatprep.subr.mxu0 0.0
    %1153 = vmatpush1.xpose.msra.mxu0 0.0
    %1154 = vmatprep.subr.mxu0 0.0
    %1155 = vmatpush1.xpose.msra.mxu0 0.0
    %1156 = vmatprep.subr.mxu0 0.0
    %1157 = vmatpush1.xpose.msra.mxu0 0.0
    %1158 = vmatprep.subr.mxu0 0.0
    %1159 = vmatpush1.xpose.msra.mxu0 0.0
    %1160 = vmatprep.subr.mxu0 0.0
    %1161 = vmatpush1.xpose.msra.mxu0 0.0
    %1162 = vmatprep.subr.mxu0 0.0
    %1163 = vmatpush1.xpose.msra.mxu0 0.0
    %1164 = vmatprep.subr.mxu0 0.0
    %1165 = vmatpush1.xpose.msra.mxu0 0.0
    %1166 = vmatprep.subr.mxu0 0.0
    %1167 = vmatpush1.xpose.msra.mxu0 0.0
    %1168 = vmatprep.subr.mxu0 0.0
    %1169 = vmatpush1.xpose.msra.mxu0 0.0
    %1170 = vmatprep.subr.mxu0 0.0
    %1171 = vmatpush1.xpose.msra.mxu0 0.0
    %1172 = vmatprep.subr.mxu0 0.0
    %1173 = vmatpush1.xpose.msra.mxu0 0.0
    %1174 = vmatprep.subr.mxu0 0.0
    %1175 = vmatpush1.xpose.msra.mxu0 0.0
    %1176 = vmatprep.subr.mxu0 0.0
    %1177 = vmatpush1.xpose.msra.mxu0 0.0
    %1178 = vmatprep.subr.mxu0 0.0
    %1179 = vmatpush1.xpose.msra.mxu0 0.0
    %1180 = vmatprep.subr.mxu0 0.0
    %1181 = vmatpush1.xpose.msra.mxu0 0.0
    %1182 = vmatprep.mubr.f32.mxu0 0.0
    %1183 = vmatmul.mubr.f32.gmra.mrb[0].mxu0 %v1111
    %v1184 = vpop.f32.mrb[0].mxu0
    %v1185 = vadd.f32 %v1100, %v1184
    %v1186 = vpop.f32.mrb[0].mxu0
    %1187 = vmatprep.mubr.f32.mxu0 0.0
    %1188 = vmatmul.mubr.f32.gmra.mrb[0].mxu0 %v1114
    %v1189 = vpop.f32.mrb[0].mxu0
    %v1190 = vadd.f32 %v1105, %v1189
    %v1191 = vpop.f32.mrb[0].mxu0
    %1192 = vdwg.mxu0
    %vm1193 = vcmask 64512
    %1194 = vst.msk [vmem:[%s2] sm:$0xff] %vm1193, %v1185
    %1195 = vst.msk [vmem:[%s2 + $0x8] sm:$0xff] %vm1193, %v1190
    // Predicated region
    $region14: #{forward.1} parent=1 // pred_check
      _
    $region15: #{forward.1} parent=1 // pred_check_branch
      %1197 = sbr.rel (0) target = $region17
    $region16: #{forward.1} parent=1 // pred_region
      _
    $region17: #{forward.1} parent=1 // pred_fallthru
      _
    // Predicated region
    $region18: #{forward.1} parent=1 // pred_check
      _
    $region19: #{forward.1} parent=1 // pred_check_branch
      %1199 = sbr.rel (0) target = $region21
    $region20: #{forward.1} parent=1 // pred_region
      _
    $region21: #{forward.1} parent=1 // pred_fallthru
      _
    %1200 = vsyncpa [#allocation3], 1

</llo_original>
